<compile_context>
chip_gen: v6e
topology: v6e:2x2x1
jax: 0.10.0
libtpu: 0.0.40
codegen_flags: <defaults>
</compile_context>

<pallas_src>
import functools
import math

import jax
import jax.numpy as jnp
from jax.experimental import pallas as pl
from jax.experimental.pallas import tpu as pltpu


# ----------------------------------------------------------------------------
# Fused Pallas kernel: one grid step = one strip of `wwin` windows.
# ----------------------------------------------------------------------------
def _local_attn_strip_kernel(x_ref, p_ref, wv_ref, bv_ref, w2_ref, b2_ref, o_ref):
    # x_ref / o_ref : (ws, wwin, ws, C)  strip of wwin windows, rows indexed (m1, ww, m2)
    # p_ref         : (M, M)  softmax(relative-position bias), constant across grid
    # wv_ref        : (C, C)  V columns of the QKV projection weight
    # bv_ref        : (1, C)  f32
    # w2_ref        : (C, C)  output projection weight
    # b2_ref        : (1, C)  f32
    ws, wwin, _, C = x_ref.shape
    M = ws * ws

    xs = x_ref[...]                               # (ws, wwin, ws, C), one load
    p = p_ref[...]                                # (M, M)
    wv = wv_ref[...]                              # (C, C)
    w2 = w2_ref[...]                              # (C, C)
    bv = bv_ref[...].astype(jnp.float32)          # (1, C)
    b2 = b2_ref[...].astype(jnp.float32)          # (1, C)

    # Static (unrolled) loop over the windows of this strip.  Each window is
    # three small MXU matmuls; the kernel as a whole is HBM-bound so the MXU
    # has plenty of slack.  Accumulation is always f32.
    for ww in range(wwin):
        xw = xs[:, ww].reshape(M, C)                                         # (M, C)
        v = jnp.dot(xw, wv, preferred_element_type=jnp.float32) + bv         # (M, C) f32
        a = jnp.dot(p, v.astype(p.dtype),
                    preferred_element_type=jnp.float32)                      # (M, C) f32
        y = jnp.dot(a.astype(w2.dtype), w2,
                    preferred_element_type=jnp.float32) + b2                 # (M, C) f32
        o_ref[:, ww, :, :] = y.reshape(ws, ws, C).astype(o_ref.dtype)
    # TODO(synk): when C < 128 these stores are lane-masked (C/128 occupancy);
    # packing several tokens per 128-lane row would need an in-kernel relayout
    # that costs more than it saves at these sizes.


# ----------------------------------------------------------------------------
# Parameters / relative-position bias / one-time preparation (plain JAX glue)
# ----------------------------------------------------------------------------
def init_params(key, embed_dim, window_size):
    k1, k2, k3, k4, k5 = jax.random.split(key, 5)
    bound = 1.0 / math.sqrt(embed_dim)
    return dict(
        w1=jax.random.uniform(k1, (embed_dim, 3 * embed_dim), jnp.float32, -bound, bound),
        b1=jax.random.uniform(k2, (1, 3 * embed_dim), jnp.float32, -bound, bound),
        w2=jax.random.uniform(k3, (embed_dim, embed_dim), jnp.float32, -bound, bound),
        b2=jax.random.uniform(k4, (1, embed_dim), jnp.float32, -bound, bound),
        table=jax.random.normal(k5, ((2 * window_size - 1) ** 2, 1), jnp.float32),
    )


def relative_position_bias(table, window_size):
    ws = window_size
    coords = jnp.stack(jnp.meshgrid(jnp.arange(ws), jnp.arange(ws), indexing="ij"))
    cf = coords.reshape(2, -1)                                   # (2, M)
    rel = cf[:, :, None] - cf[:, None, :]                        # (2, M, M)
    rel = jnp.transpose(rel, (1, 2, 0))                          # (M, M, 2)
    rel = rel.at[:, :, 0].add(ws - 1)
    rel = rel.at[:, :, 1].add(ws - 1)
    rel = rel.at[:, :, 0].multiply(2 * ws - 1)
    idx = rel.sum(-1)                                            # (M, M)
    bias = table[idx.reshape(-1)].reshape(ws * ws, ws * ws, 1)
    return jnp.transpose(bias, (2, 0, 1))[0]                     # (M, M)


def prepare_params(params, *, window_size, compute_dtype=jnp.float32):
    """One-time preparation (call once, outside the jitted forward):
    slice the contiguous V columns out of the QKV weight, fold the constant
    relative-position bias through its softmax, and cast matmul operands to the
    compute dtype (biases stay f32; all matmuls accumulate in f32)."""
    ws = window_size
    bias = relative_position_bias(params["table"], ws)           # (M, M) f32
    p = jax.nn.softmax(bias.astype(jnp.float32), axis=-1)        # constant attention matrix
    wv = params["w1"][:, 2::3]                                   # (C, C): V columns (K=3 innermost)
    bv = params["b1"][:, 2::3]                                   # (1, C)
    return dict(
        p=p.astype(compute_dtype),
        wv=wv.astype(compute_dtype),
        bv=bv.astype(jnp.float32),
        w2=params["w2"].astype(compute_dtype),
        b2=params["b2"].astype(jnp.float32),
    )


# ----------------------------------------------------------------------------
# Fused forward
# ----------------------------------------------------------------------------
def local_attention_forward(prepared, x, *, embed_dim, num_heads, window_size):
    B, N, C = x.shape
    assert C == embed_dim and embed_dim % num_heads == 0
    height = width = int(math.sqrt(N))
    assert height * width == N, "token count must form a square feature map"
    ws = window_size
    assert height % ws == 0 and width % ws == 0, "feature map must tile into windows"
    hwin, wwin = height // ws, width // ws
    M = ws * ws

    p, wv, bv, w2, b2 = (prepared["p"], prepared["wv"], prepared["bv"],
                         prepared["w2"], prepared["b2"])

    # Free (contiguous) view: one grid step reads a whole strip of windows,
    # which is a contiguous (ws * width * C) slab in HBM.
    x6 = x.reshape(B, hwin, ws, wwin, ws, C)

    # Explicit VMEM budget: double-buffered in/out strips + resident weights,
    # with 2x headroom, capped at 64 MiB (v7x physical VMEM per TensorCore).
    act_bytes = ws * wwin * ws * C * x.dtype.itemsize
    wgt_bytes = (M * M + 2 * C * C) * jnp.dtype(p.dtype).itemsize + 2 * C * 4
    need = 2 * 2 * act_bytes + 2 * wgt_bytes
    vmem_limit = int(min(64 * 1024 * 1024, max(8 * 1024 * 1024, 2 * need)))
    # TODO(synk): for very large embed_dim the (C, C) weights should be K-tiled
    # with an f32 accumulator instead of held as single VMEM-resident blocks.

    strip_spec = pl.BlockSpec((None, None, ws, wwin, ws, C),
                              lambda b, i: (b, i, 0, 0, 0, 0))
    const2d = lambda b, i: (0, 0)

    out6 = pl.pallas_call(
        _local_attn_strip_kernel,
        out_shape=jax.ShapeDtypeStruct((B, hwin, ws, wwin, ws, C), x.dtype),
        grid=(B, hwin),
        in_specs=[
            strip_spec,                            # x strip
            pl.BlockSpec((M, M), const2d),         # P = softmax(bias), VMEM-resident
            pl.BlockSpec((C, C), const2d),         # Wv
            pl.BlockSpec((1, C), const2d),         # bv
            pl.BlockSpec((C, C), const2d),         # W2
            pl.BlockSpec((1, C), const2d),         # b2
        ],
        out_specs=strip_spec,
        compiler_params=pltpu.CompilerParams(
            dimension_semantics=("parallel", "parallel"),
            vmem_limit_bytes=vmem_limit),
    )(x6, p, wv, bv, w2, b2)

    return out6.reshape(B, N, C)                   # free reshape


# ----------------------------------------------------------------------------
# Pure-JAX faithful reference of the original PyTorch module (for checking)
# ----------------------------------------------------------------------------
def local_attention_reference(params, x, *, embed_dim, num_heads, window_size):
    B, N, C = x.shape
    height = width = int(math.sqrt(N))
    ws = window_size
    E = embed_dim // num_heads
    M = ws * ws
    hwin, wwin = height // ws, width // ws
    h_dim = embed_dim / num_heads

    y = x.reshape(B * N, C) @ params["w1"] + params["b1"]        # (B*N, 3C)
    y = y.reshape(B, height, width, C, 3)
    y = y.reshape(B, hwin, ws, wwin, ws, num_heads, E, 3)
    y = jnp.transpose(y, (0, 5, 1, 3, 2, 4, 6, 7))               # b H h w m1 m2 E K
    y = y.reshape(B, num_heads, hwin, wwin, M, E, 3)
    q, k, v = y[..., 0], y[..., 1], y[..., 2]
    scores = jnp.einsum("bHhwme,bHhwne->bHhwmn", q, k) / math.sqrt(h_dim)
    bias = relative_position_bias(params["table"], ws)           # (M, M)
    scores = jnp.broadcast_to(bias, scores.shape)                # reference "bug": replace
    att = jax.nn.softmax(scores, axis=-1) @ v                    # (b,H,h,w,M,E)
    att = att.reshape(B, num_heads, hwin, wwin, ws, ws, E)
    att = jnp.transpose(att, (0, 2, 4, 3, 5, 1, 6))              # b h m1 w m2 H E
    att = att.reshape(B * N, num_heads * E)
    out = att @ params["w2"] + params["b2"]
    return out.reshape(B, N, C)


if __name__ == "__main__":
    B, embed_dim, num_heads, window_size = 2, 32, 4, 8
    height = width = 16
    N = height * width

    key = jax.random.PRNGKey(0)
    kx, kp = jax.random.split(key)
    x = jax.random.normal(kx, (B, N, embed_dim), jnp.float32)
    params = init_params(kp, embed_dim, window_size)

    fwd = jax.jit(functools.partial(local_attention_forward, embed_dim=embed_dim,
                                    num_heads=num_heads, window_size=window_size))

    ref = local_attention_reference(params, x, embed_dim=embed_dim,
                                    num_heads=num_heads, window_size=window_size)

    # f32 path, checked against the faithful pure-JAX reference of the module.
    prep32 = prepare_params(params, window_size=window_size, compute_dtype=jnp.float32)
    out = jax.block_until_ready(fwd(prep32, x))
    assert out.shape == (B, N, embed_dim)
    assert jnp.allclose(out, ref, atol=1e-2, rtol=1e-2), float(jnp.max(jnp.abs(out - ref)))

    # bf16 operand path (halves HBM traffic; f32 accumulation) — loose check.
    prep16 = prepare_params(params, window_size=window_size, compute_dtype=jnp.bfloat16)
    out16 = jax.block_until_ready(fwd(prep16, x.astype(jnp.bfloat16)))
    assert out16.shape == (B, N, embed_dim)
    assert jnp.allclose(out16.astype(jnp.float32), ref, atol=1e-1, rtol=1e-1), \
        float(jnp.max(jnp.abs(out16.astype(jnp.float32) - ref)))

    print("KERNEL_OK")
</pallas_src>

<mosaic_0001>
module attributes {stable_mosaic.version = 11 : i64} {
  func.func @_local_attn_strip_kernel(%arg0: i32, %arg1: i32, %arg2: memref<1x1x8x2x8x32xf32, #tpu.memory_space<vmem>>, %arg3: memref<64x64xf32, #tpu.memory_space<vmem>>, %arg4: memref<32x32xf32, #tpu.memory_space<vmem>>, %arg5: memref<1x32xf32, #tpu.memory_space<vmem>>, %arg6: memref<32x32xf32, #tpu.memory_space<vmem>>, %arg7: memref<1x32xf32, #tpu.memory_space<vmem>>, %arg8: memref<1x1x8x2x8x32xf32, #tpu.memory_space<vmem>>) attributes {dimension_semantics = [#tpu.dimension_semantics<parallel>, #tpu.dimension_semantics<parallel>], iteration_bounds = array<i64: 2, 2>, scalar_prefetch = 0 : i64, scratch_operands = 0 : i64, tpu.core_type = #tpu.core_type<tc>, window_params = [{transform_indices = @transform_0, window_bounds = array<i64: 1, 1, 8, 2, 8, 32>}, {pipeline_mode = #tpu.pipeline_mode<synchronous>, transform_indices = @transform_1, window_bounds = array<i64: 64, 64>}, {pipeline_mode = #tpu.pipeline_mode<synchronous>, transform_indices = @transform_2, window_bounds = array<i64: 32, 32>}, {pipeline_mode = #tpu.pipeline_mode<synchronous>, transform_indices = @transform_3, window_bounds = array<i64: 1, 32>}, {pipeline_mode = #tpu.pipeline_mode<synchronous>, transform_indices = @transform_4, window_bounds = array<i64: 32, 32>}, {pipeline_mode = #tpu.pipeline_mode<synchronous>, transform_indices = @transform_5, window_bounds = array<i64: 1, 32>}, {transform_indices = @transform_6, window_bounds = array<i64: 1, 1, 8, 2, 8, 32>}]} {
    %c0 = arith.constant 0 : index
    %c0_0 = arith.constant 0 : index
    %c0_1 = arith.constant 0 : index
    %c0_2 = arith.constant 0 : index
    %c0_3 = arith.constant 0 : index
    %c0_4 = arith.constant 0 : index
    %0 = vector.load %arg2[%c0, %c0_0, %c0_1, %c0_2, %c0_3, %c0_4] : memref<1x1x8x2x8x32xf32, #tpu.memory_space<vmem>>, vector<1x1x8x2x8x32xf32>
    %1 = vector.shape_cast %0 : vector<1x1x8x2x8x32xf32> to vector<8x2x8x32xf32>
    %c0_5 = arith.constant 0 : index
    %c0_6 = arith.constant 0 : index
    %2 = vector.load %arg3[%c0_5, %c0_6] : memref<64x64xf32, #tpu.memory_space<vmem>>, vector<64x64xf32>
    %c0_7 = arith.constant 0 : index
    %c0_8 = arith.constant 0 : index
    %3 = vector.load %arg4[%c0_7, %c0_8] : memref<32x32xf32, #tpu.memory_space<vmem>>, vector<32x32xf32>
    %c0_9 = arith.constant 0 : index
    %c0_10 = arith.constant 0 : index
    %4 = vector.load %arg6[%c0_9, %c0_10] : memref<32x32xf32, #tpu.memory_space<vmem>>, vector<32x32xf32>
    %c0_11 = arith.constant 0 : index
    %c0_12 = arith.constant 0 : index
    %5 = vector.load %arg5[%c0_11, %c0_12] : memref<1x32xf32, #tpu.memory_space<vmem>>, vector<1x32xf32>
    %c0_13 = arith.constant 0 : index
    %c0_14 = arith.constant 0 : index
    %6 = vector.load %arg7[%c0_13, %c0_14] : memref<1x32xf32, #tpu.memory_space<vmem>>, vector<1x32xf32>
    %7 = vector.extract_strided_slice %1 {offsets = [0, 0, 0, 0], sizes = [8, 1, 8, 32], strides = [1, 1, 1, 1]} : vector<8x2x8x32xf32> to vector<8x1x8x32xf32>
    %8 = vector.shape_cast %7 : vector<8x1x8x32xf32> to vector<8x8x32xf32>
    %9 = vector.shape_cast %8 : vector<8x8x32xf32> to vector<64x32xf32>
    %cst = arith.constant dense<0.000000e+00> : vector<64x32xf32>
    %10 = tpu.matmul %9, %3, %cst {dimension_numbers = #tpu.dot_dimension_numbers<[1], [0], [0], [1], [0, 0, 1, 1], [], []>} : vector<64x32xf32>, vector<32x32xf32>, vector<64x32xf32> -> vector<64x32xf32>
    %11 = vector.broadcast %5 : vector<1x32xf32> to vector<64x32xf32>
    %12 = arith.addf %10, %11 : vector<64x32xf32>
    %cst_15 = arith.constant dense<0.000000e+00> : vector<64x32xf32>
    %13 = tpu.matmul %2, %12, %cst_15 {dimension_numbers = #tpu.dot_dimension_numbers<[1], [0], [0], [1], [0, 0, 1, 1], [], []>} : vector<64x64xf32>, vector<64x32xf32>, vector<64x32xf32> -> vector<64x32xf32>
    %cst_16 = arith.constant dense<0.000000e+00> : vector<64x32xf32>
    %14 = tpu.matmul %13, %4, %cst_16 {dimension_numbers = #tpu.dot_dimension_numbers<[1], [0], [0], [1], [0, 0, 1, 1], [], []>} : vector<64x32xf32>, vector<32x32xf32>, vector<64x32xf32> -> vector<64x32xf32>
    %15 = vector.broadcast %6 : vector<1x32xf32> to vector<64x32xf32>
    %16 = arith.addf %14, %15 : vector<64x32xf32>
    %17 = vector.shape_cast %16 : vector<64x32xf32> to vector<8x8x32xf32>
    %c0_17 = arith.constant 0 : index
    %c0_18 = arith.constant 0 : index
    %c0_19 = arith.constant 0 : index
    %c0_20 = arith.constant 0 : index
    %c0_21 = arith.constant 0 : index
    %c0_22 = arith.constant 0 : index
    %18 = vector.load %arg8[%c0_17, %c0_18, %c0_19, %c0_20, %c0_21, %c0_22] : memref<1x1x8x2x8x32xf32, #tpu.memory_space<vmem>>, vector<1x1x8x1x8x32xf32>
    %19 = vector.shape_cast %18 : vector<1x1x8x1x8x32xf32> to vector<8x8x32xf32>
    %20 = vector.shape_cast %17 : vector<8x8x32xf32> to vector<1x1x8x1x8x32xf32>
    tpu.vector_store %arg8[%c0_17, %c0_18, %c0_19, %c0_20, %c0_21, %c0_22], %20 {strides = array<i32>} : memref<1x1x8x2x8x32xf32, #tpu.memory_space<vmem>>, vector<1x1x8x1x8x32xf32>,
    %21 = vector.extract_strided_slice %1 {offsets = [0, 1, 0, 0], sizes = [8, 1, 8, 32], strides = [1, 1, 1, 1]} : vector<8x2x8x32xf32> to vector<8x1x8x32xf32>
    %22 = vector.shape_cast %21 : vector<8x1x8x32xf32> to vector<8x8x32xf32>
    %23 = vector.shape_cast %22 : vector<8x8x32xf32> to vector<64x32xf32>
    %cst_23 = arith.constant dense<0.000000e+00> : vector<64x32xf32>
    %24 = tpu.matmul %23, %3, %cst_23 {dimension_numbers = #tpu.dot_dimension_numbers<[1], [0], [0], [1], [0, 0, 1, 1], [], []>} : vector<64x32xf32>, vector<32x32xf32>, vector<64x32xf32> -> vector<64x32xf32>
    %25 = vector.broadcast %5 : vector<1x32xf32> to vector<64x32xf32>
    %26 = arith.addf %24, %25 : vector<64x32xf32>
    %cst_24 = arith.constant dense<0.000000e+00> : vector<64x32xf32>
    %27 = tpu.matmul %2, %26, %cst_24 {dimension_numbers = #tpu.dot_dimension_numbers<[1], [0], [0], [1], [0, 0, 1, 1], [], []>} : vector<64x64xf32>, vector<64x32xf32>, vector<64x32xf32> -> vector<64x32xf32>
    %cst_25 = arith.constant dense<0.000000e+00> : vector<64x32xf32>
    %28 = tpu.matmul %27, %4, %cst_25 {dimension_numbers = #tpu.dot_dimension_numbers<[1], [0], [0], [1], [0, 0, 1, 1], [], []>} : vector<64x32xf32>, vector<32x32xf32>, vector<64x32xf32> -> vector<64x32xf32>
    %29 = vector.broadcast %6 : vector<1x32xf32> to vector<64x32xf32>
    %30 = arith.addf %28, %29 : vector<64x32xf32>
    %31 = vector.shape_cast %30 : vector<64x32xf32> to vector<8x8x32xf32>
    %c0_26 = arith.constant 0 : index
    %c0_27 = arith.constant 0 : index
    %c0_28 = arith.constant 0 : index
    %c1 = arith.constant 1 : index
    %c0_29 = arith.constant 0 : index
    %c0_30 = arith.constant 0 : index
    %32 = vector.load %arg8[%c0_26, %c0_27, %c0_28, %c1, %c0_29, %c0_30] : memref<1x1x8x2x8x32xf32, #tpu.memory_space<vmem>>, vector<1x1x8x1x8x32xf32>
    %33 = vector.shape_cast %32 : vector<1x1x8x1x8x32xf32> to vector<8x8x32xf32>
    %34 = vector.shape_cast %31 : vector<8x8x32xf32> to vector<1x1x8x1x8x32xf32>
    tpu.vector_store %arg8[%c0_26, %c0_27, %c0_28, %c1, %c0_29, %c0_30], %34 {strides = array<i32>} : memref<1x1x8x2x8x32xf32, #tpu.memory_space<vmem>>, vector<1x1x8x1x8x32xf32>,
    return
  }
  func.func @transform_0(%arg0: i32, %arg1: i32) -> (i32, i32, i32, i32, i32, i32) {
    %c0_i32 = arith.constant 0 : i32
    %c0_i32_0 = arith.constant 0 : i32
    %c0_i32_1 = arith.constant 0 : i32
    %c0_i32_2 = arith.constant 0 : i32
    %c0_i32_3 = arith.constant 0 : i32
    return %arg0, %arg1, %c0_i32, %c0_i32_0, %c0_i32_1, %c0_i32_2 : i32, i32, i32, i32, i32, i32
  }
  func.func @transform_1(%arg0: i32, %arg1: i32) -> (i32, i32) {
    %c0_i32 = arith.constant 0 : i32
    %c0_i32_0 = arith.constant 0 : i32
    %c0_i32_1 = arith.constant 0 : i32
    return %c0_i32, %c0_i32_0 : i32, i32
  }
  func.func @transform_2(%arg0: i32, %arg1: i32) -> (i32, i32) {
    %c0_i32 = arith.constant 0 : i32
    %c0_i32_0 = arith.constant 0 : i32
    %c0_i32_1 = arith.constant 0 : i32
    return %c0_i32, %c0_i32_0 : i32, i32
  }
  func.func @transform_3(%arg0: i32, %arg1: i32) -> (i32, i32) {
    %c0_i32 = arith.constant 0 : i32
    %c0_i32_0 = arith.constant 0 : i32
    %c0_i32_1 = arith.constant 0 : i32
    return %c0_i32, %c0_i32_0 : i32, i32
  }
  func.func @transform_4(%arg0: i32, %arg1: i32) -> (i32, i32) {
    %c0_i32 = arith.constant 0 : i32
    %c0_i32_0 = arith.constant 0 : i32
    %c0_i32_1 = arith.constant 0 : i32
    return %c0_i32, %c0_i32_0 : i32, i32
  }
  func.func @transform_5(%arg0: i32, %arg1: i32) -> (i32, i32) {
    %c0_i32 = arith.constant 0 : i32
    %c0_i32_0 = arith.constant 0 : i32
    %c0_i32_1 = arith.constant 0 : i32
    return %c0_i32, %c0_i32_0 : i32, i32
  }
  func.func @transform_6(%arg0: i32, %arg1: i32) -> (i32, i32, i32, i32, i32, i32) {
    %c0_i32 = arith.constant 0 : i32
    %c0_i32_0 = arith.constant 0 : i32
    %c0_i32_1 = arith.constant 0 : i32
    %c0_i32_2 = arith.constant 0 : i32
    %c0_i32_3 = arith.constant 0 : i32
    return %arg0, %arg1, %c0_i32, %c0_i32_0, %c0_i32_1, %c0_i32_2 : i32, i32, i32, i32, i32, i32
  }
}

</mosaic_0001>

<llo_original>
// kernel: local_attention_forward.1
$region0: #{local_attention_forward.1}
  #allocation0 [shape = 'u32[]', space=smem, size = 0x4, offset = 0x4, fixed_abs, tag = 'smem constant byte address 0x4 - core index']
  #allocation1 [shape = 'u32[144,128]{1,0:T(1,128)}', space=vmem, size = 0x12000, scoped, tag = 'internal scratch']
  %s0 = inlined_call_operand.vmem [shape: f32[2,2,8,2,8,32], index: 0, kind: input, shape index: {}]
  %s1 = inlined_call_operand.vmem [shape: f32[64,64], index: 1, kind: input, shape index: {}]
  %s2 = inlined_call_operand.vmem [shape: f32[32,32], index: 2, kind: input, shape index: {}]
  %s3 = inlined_call_operand.vmem [shape: f32[1,32], index: 3, kind: input, shape index: {}]
  %s4 = inlined_call_operand.vmem [shape: f32[32,32], index: 4, kind: input, shape index: {}]
  %s5 = inlined_call_operand.vmem [shape: f32[1,32], index: 5, kind: input, shape index: {}]
  %s6 = inlined_call_operand.vmem [shape: f32[2,2,8,2,8,32], index: 6, kind: output, shape index: {}]
  %s7 = sld [smem:[#allocation0]]
  $region57: #{local_attention_forward.1} parent=0
    _
  %s9 = ssub.s32 1, %s7
  %s10 = scalar_select 0, %s9, %s7
  loop: start=0, step=1, limit=6
  $region2: #{local_attention_forward.1} parent=0 // loop_pre_header
    _
  $region3: #{local_attention_forward.1} parent=0 // loop_header
    %s12 = sphi 0, %s16
    %p13 = scmp.ge.s32.totalorder %s12, 6
    %s19 = sphi 0, %s31
    %s20 = sphi 0, %s27
    %s21 = sphi 0, %s19
    %s22 = sphi 0, %s20
    %s23 = sphi 0, %s21
    %s24 = sphi 0, %s22
    %s36 = sphi 0, %s38
    %s39 = sphi 0, %s36
    %s40 = sphi 0, %s39
    %s56 = sphi 0, %s40
    %s60 = sphi 0, %s60
    %s62 = sphi 0, %s60
    %s63 = sphi 0, %s62
    %s77 = sphi 0, %s63
    %s81 = sphi 0, %s81
    %s83 = sphi 0, %s81
    %s84 = sphi 0, %s83
    %s98 = sphi 0, %s84
    %s102 = sphi 0, %s102
    %s104 = sphi 0, %s102
    %s105 = sphi 0, %s104
    %s119 = sphi 0, %s105
    %s123 = sphi 0, %s123
    %s125 = sphi 0, %s123
    %s126 = sphi 0, %s125
    %s140 = sphi 0, %s126
    %s144 = sphi 0, %s144
    %s146 = sphi 0, %s144
    %s147 = sphi 0, %s146
    %s161 = sphi 0, %s147
    %s169 = sphi 0, %s171
    %s172 = sphi 0, %s169
    %s173 = sphi 0, %s172
    %s189 = sphi 0, %s173
  $region4: #{local_attention_forward.1} parent=0 // loop_header_branch
    %15 = sbr.rel (%p13) target = $region8
  $region5: #{local_attention_forward.1} parent=0 // loop_body
    %s17 = ssub.s32 %s12, 1
    %s18 = ssub.s32 %s12, 2
    %s25 = sadd.s32 1, %s20
    %p26 = scmp.ge.s32.totalorder %s25, 2
    %s27 = scalar_select %p26, 0, %s25
    %s28 = sadd.s32 1, %s19
    %s29 = scalar_select %p26, %s28, %s19
    %p30 = scmp.ge.s32.totalorder %s29, 2
    %s31 = scalar_select %p30, 0, %s29
    %s32 = ssub.s32 %s19, %s31
    %s33 = ssub.s32 %s20, %s27
    %s34 = sor.u32 %s32, %s33
    %p35 = scmp.eq.s32.totalorder %s34, 0
    %s37 = sadd.s32 %s36, 1
    %s38 = scalar_select %p35, %s36, %s37
    %p41 = pneg %p35
    %p42 = scmp.eq.s32.totalorder %s12, 3
    %p43 = por %p41, %p42
    %p44 = scmp.ne.s32.totalorder %s36, %s39
    %p45 = scmp.eq.s32.totalorder %s12, 0
    %p46 = por %p44, %p45
    %p47 = scmp.ne.s32.totalorder %s36, %s39
    %p48 = scmp.eq.s32.totalorder %s17, 3
    %p49 = por %p47, %p48
    %p50 = scmp.ne.s32.totalorder %s39, %s40
    %p51 = scmp.eq.s32.totalorder %s17, 0
    %p52 = por %p50, %p51
    %p53 = scmp.ne.s32.totalorder %s39, %s40
    %p54 = scmp.eq.s32.totalorder %s18, 3
    %p55 = por %p53, %p54
    %p57 = scmp.ne.s32.totalorder %s40, %s56
    %p58 = scmp.eq.s32.totalorder %s18, 0
    %p59 = por %p57, %p58
    %s61 = sadd.s32 %s60, 1
    %p64 = scmp.eq.s32.totalorder %s12, 3
    %p65 = scmp.ne.s32.totalorder %s60, %s62
    %p66 = scmp.eq.s32.totalorder %s12, 0
    %p67 = por %p65, %p66
    %p68 = scmp.ne.s32.totalorder %s60, %s62
    %p69 = scmp.eq.s32.totalorder %s17, 3
    %p70 = por %p68, %p69
    %p71 = scmp.ne.s32.totalorder %s62, %s63
    %p72 = scmp.eq.s32.totalorder %s17, 0
    %p73 = por %p71, %p72
    %p74 = scmp.ne.s32.totalorder %s62, %s63
    %p75 = scmp.eq.s32.totalorder %s18, 3
    %p76 = por %p74, %p75
    %p78 = scmp.ne.s32.totalorder %s63, %s77
    %p79 = scmp.eq.s32.totalorder %s18, 0
    %p80 = por %p78, %p79
    %s82 = sadd.s32 %s81, 1
    %p85 = scmp.eq.s32.totalorder %s12, 3
    %p86 = scmp.ne.s32.totalorder %s81, %s83
    %p87 = scmp.eq.s32.totalorder %s12, 0
    %p88 = por %p86, %p87
    %p89 = scmp.ne.s32.totalorder %s81, %s83
    %p90 = scmp.eq.s32.totalorder %s17, 3
    %p91 = por %p89, %p90
    %p92 = scmp.ne.s32.totalorder %s83, %s84
    %p93 = scmp.eq.s32.totalorder %s17, 0
    %p94 = por %p92, %p93
    %p95 = scmp.ne.s32.totalorder %s83, %s84
    %p96 = scmp.eq.s32.totalorder %s18, 3
    %p97 = por %p95, %p96
    %p99 = scmp.ne.s32.totalorder %s84, %s98
    %p100 = scmp.eq.s32.totalorder %s18, 0
    %p101 = por %p99, %p100
    %s103 = sadd.s32 %s102, 1
    %p106 = scmp.eq.s32.totalorder %s12, 3
    %p107 = scmp.ne.s32.totalorder %s102, %s104
    %p108 = scmp.eq.s32.totalorder %s12, 0
    %p109 = por %p107, %p108
    %p110 = scmp.ne.s32.totalorder %s102, %s104
    %p111 = scmp.eq.s32.totalorder %s17, 3
    %p112 = por %p110, %p111
    %p113 = scmp.ne.s32.totalorder %s104, %s105
    %p114 = scmp.eq.s32.totalorder %s17, 0
    %p115 = por %p113, %p114
    %p116 = scmp.ne.s32.totalorder %s104, %s105
    %p117 = scmp.eq.s32.totalorder %s18, 3
    %p118 = por %p116, %p117
    %p120 = scmp.ne.s32.totalorder %s105, %s119
    %p121 = scmp.eq.s32.totalorder %s18, 0
    %p122 = por %p120, %p121
    %s124 = sadd.s32 %s123, 1
    %p127 = scmp.eq.s32.totalorder %s12, 3
    %p128 = scmp.ne.s32.totalorder %s123, %s125
    %p129 = scmp.eq.s32.totalorder %s12, 0
    %p130 = por %p128, %p129
    %p131 = scmp.ne.s32.totalorder %s123, %s125
    %p132 = scmp.eq.s32.totalorder %s17, 3
    %p133 = por %p131, %p132
    %p134 = scmp.ne.s32.totalorder %s125, %s126
    %p135 = scmp.eq.s32.totalorder %s17, 0
    %p136 = por %p134, %p135
    %p137 = scmp.ne.s32.totalorder %s125, %s126
    %p138 = scmp.eq.s32.totalorder %s18, 3
    %p139 = por %p137, %p138
    %p141 = scmp.ne.s32.totalorder %s126, %s140
    %p142 = scmp.eq.s32.totalorder %s18, 0
    %p143 = por %p141, %p142
    %s145 = sadd.s32 %s144, 1
    %p148 = scmp.eq.s32.totalorder %s12, 3
    %p149 = scmp.ne.s32.totalorder %s144, %s146
    %p150 = scmp.eq.s32.totalorder %s12, 0
    %p151 = por %p149, %p150
    %p152 = scmp.ne.s32.totalorder %s144, %s146
    %p153 = scmp.eq.s32.totalorder %s17, 3
    %p154 = por %p152, %p153
    %p155 = scmp.ne.s32.totalorder %s146, %s147
    %p156 = scmp.eq.s32.totalorder %s17, 0
    %p157 = por %p155, %p156
    %p158 = scmp.ne.s32.totalorder %s146, %s147
    %p159 = scmp.eq.s32.totalorder %s18, 3
    %p160 = por %p158, %p159
    %p162 = scmp.ne.s32.totalorder %s147, %s161
    %p163 = scmp.eq.s32.totalorder %s18, 0
    %p164 = por %p162, %p163
    %s165 = ssub.s32 %s19, %s31
    %s166 = ssub.s32 %s20, %s27
    %s167 = sor.u32 %s165, %s166
    %p168 = scmp.eq.s32.totalorder %s167, 0
    %s170 = sadd.s32 %s169, 1
    %s171 = scalar_select %p168, %s169, %s170
    %p174 = pneg %p168
    %p175 = scmp.eq.s32.totalorder %s12, 3
    %p176 = por %p174, %p175
    %p177 = scmp.ne.s32.totalorder %s169, %s172
    %p178 = scmp.eq.s32.totalorder %s12, 0
    %p179 = por %p177, %p178
    %p180 = scmp.ne.s32.totalorder %s169, %s172
    %p181 = scmp.eq.s32.totalorder %s17, 3
    %p182 = por %p180, %p181
    %p183 = scmp.ne.s32.totalorder %s172, %s173
    %p184 = scmp.eq.s32.totalorder %s17, 0
    %p185 = por %p183, %p184
    %p186 = scmp.ne.s32.totalorder %s172, %s173
    %p187 = scmp.eq.s32.totalorder %s18, 3
    %p188 = por %p186, %p187
    %p190 = scmp.ne.s32.totalorder %s173, %s189
    %p191 = scmp.eq.s32.totalorder %s18, 0
    %p192 = por %p190, %p191
    %p193 = scmp.le.s32.totalorder 1, %s12
    %p194 = scmp.lt.s32.totalorder %s12, 5
    %p195 = pnand %p193, %p194
    %p196 = pneg %p195
    // Predicated region
    $region9: #{local_attention_forward.1} parent=5 // pred_check
      _
    $region10: #{local_attention_forward.1} parent=5 // pred_check_branch
      %198 = sbr.rel (%p195) target = $region12
    $region11: #{local_attention_forward.1} parent=5 // pred_region
      %s199 = ssub.s32 %s12, 1
      // Predicated region
      $region13: #{local_attention_forward.1} parent=11 // pred_check
        %p200 = pneg %p73
      $region14: #{local_attention_forward.1} parent=11 // pred_check_branch
        %202 = sbr.rel (%p200) target = $region16
      $region15: #{local_attention_forward.1} parent=11 // pred_region
        _
      $region16: #{local_attention_forward.1} parent=11 // pred_fallthru
        _
      // Predicated region
      $region17: #{local_attention_forward.1} parent=11 // pred_check
        %p203 = pneg %p94
      $region18: #{local_attention_forward.1} parent=11 // pred_check_branch
        %205 = sbr.rel (%p203) target = $region20
      $region19: #{local_attention_forward.1} parent=11 // pred_region
        _
      $region20: #{local_attention_forward.1} parent=11 // pred_fallthru
        _
      // Predicated region
      $region21: #{local_attention_forward.1} parent=11 // pred_check
        %p206 = pneg %p115
      $region22: #{local_attention_forward.1} parent=11 // pred_check_branch
        %208 = sbr.rel (%p206) target = $region24
      $region23: #{local_attention_forward.1} parent=11 // pred_region
        _
      $region24: #{local_attention_forward.1} parent=11 // pred_fallthru
        _
      // Predicated region
      $region25: #{local_attention_forward.1} parent=11 // pred_check
        %p209 = pneg %p136
      $region26: #{local_attention_forward.1} parent=11 // pred_check_branch
        %211 = sbr.rel (%p209) target = $region28
      $region27: #{local_attention_forward.1} parent=11 // pred_region
        _
      $region28: #{local_attention_forward.1} parent=11 // pred_fallthru
        _
      // Predicated region
      $region29: #{local_attention_forward.1} parent=11 // pred_check
        %p212 = pneg %p157
      $region30: #{local_attention_forward.1} parent=11 // pred_check_branch
        %214 = sbr.rel (%p212) target = $region32
      $region31: #{local_attention_forward.1} parent=11 // pred_region
        _
      $region32: #{local_attention_forward.1} parent=11 // pred_fallthru
        _
    $region12: #{local_attention_forward.1} parent=5 // pred_fallthru
      _
    %p215 = scmp.lt.s32.totalorder %s12, 4
    // Predicated region
    $region33: #{local_attention_forward.1} parent=5 // pred_check
      %p216 = pneg %p215
    $region34: #{local_attention_forward.1} parent=5 // pred_check_branch
      %218 = sbr.rel (%p216) target = $region36
    $region35: #{local_attention_forward.1} parent=5 // pred_region
      // Predicated region
      $region37: #{local_attention_forward.1} parent=35 // pred_check
        %p219 = pneg %p46
      $region38: #{local_attention_forward.1} parent=35 // pred_check_branch
        %221 = sbr.rel (%p219) target = $region40
      $region39: #{local_attention_forward.1} parent=35 // pred_region
        %p222 = scmp.lt.s32.totalorder %s19, 1
        %s223 = scalar_select %p222, %s19, 1
        %p224 = scmp.lt.s32.totalorder %s20, 1
        %s225 = scalar_select %p224, %s20, 1
        %s226 = smul.addr %s225, 16
        %s227 = smul.addr %s223, 32
        %s228 = sadd.s32 %s226, %s227
        %s229 = smul.addr %s228, 8
        %s230 = scalar_lea.vmem %s0, %s229
      $region40: #{local_attention_forward.1} parent=35 // pred_fallthru
        _
    $region36: #{local_attention_forward.1} parent=5 // pred_fallthru
      _
    %p231 = scmp.le.s32.totalorder 1, %s12
    %p232 = scmp.lt.s32.totalorder %s12, 5
    %p233 = pnand %p231, %p232
    %p234 = pneg %p233
    // Predicated region
    $region41: #{local_attention_forward.1} parent=5 // pred_check
      _
    $region42: #{local_attention_forward.1} parent=5 // pred_check_branch
      %236 = sbr.rel (%p233) target = $region44
    $region43: #{local_attention_forward.1} parent=5 // pred_region
      %s237 = ssub.s32 %s12, 1
      %p238 = scmp.lt.s32.totalorder %s21, 1
      %s239 = scalar_select %p238, %s21, 1
      %p240 = scmp.lt.s32.totalorder %s22, 1
      %s241 = scalar_select %p240, %s22, 1
      %s242 = smul.addr %s241, 16
      %s243 = smul.addr %s239, 32
      %s244 = sadd.s32 %s242, %s243
      %s245 = smul.addr %s244, 8
      %s246 = scalar_lea.vmem %s0, %s245
      %p247 = pneg %p52
      %p248 = pneg %p49
      %p249 = pneg %p73
      %p250 = pneg %p70
      %p251 = pneg %p94
      %p252 = pneg %p91
      %p253 = pneg %p115
      %p254 = pneg %p112
      %p255 = pneg %p136
      %p256 = pneg %p133
      %p257 = pneg %p157
      %p258 = pneg %p154
      %p259 = pneg %p185
      %p260 = pneg %p182
      %p261 = scmp.lt.s32.totalorder %s21, 1
      %s262 = scalar_select %p261, %s21, 1
      %p263 = scmp.lt.s32.totalorder %s22, 1
      %s264 = scalar_select %p263, %s22, 1
      %s265 = smul.addr %s264, 16
      %s266 = smul.addr %s262, 32
      %s267 = sadd.s32 %s265, %s266
      %s268 = smul.addr %s267, 8
      %s269 = scalar_lea.vmem %s6, %s268
      %p270 = scmp.lt.s32.totalorder %s21, 1
      %s271 = scalar_select %p270, %s21, 1
      %p272 = scmp.lt.s32.totalorder %s22, 1
      %s273 = scalar_select %p272, %s22, 1
      %s274 = smul.addr %s273, 16
      %s275 = smul.addr %s271, 32
      %s276 = sadd.s32 %s274, %s275
      %s277 = smul.addr %s276, 8
      %s278 = scalar_lea.vmem %s0, %s277
      %p279 = scmp.lt.s32.totalorder %s21, 1
      %s280 = scalar_select %p279, %s21, 1
      %p281 = scmp.lt.s32.totalorder %s22, 1
      %s282 = scalar_select %p281, %s22, 1
      %s283 = smul.addr %s282, 16
      %s284 = smul.addr %s280, 32
      %s285 = sadd.s32 %s283, %s284
      %s286 = smul.addr %s285, 8
      %s287 = scalar_lea.vmem %s6, %s286
      %v288 = vld [vmem:[%s278] sm:$0xff]
      %v289 = vld [vmem:[%s278 + $0x8] sm:$0xff]
      %v290 = vld [vmem:[%s278 + $0x10] sm:$0xff]
      %v291 = vld [vmem:[%s278 + $0x18] sm:$0xff]
      %v292 = vld [vmem:[%s278 + $0x20] sm:$0xff]
      %v293 = vld [vmem:[%s278 + $0x28] sm:$0xff]
      %v294 = vld [vmem:[%s278 + $0x30] sm:$0xff]
      %v295 = vld [vmem:[%s278 + $0x38] sm:$0xff]
      %v296 = vld [vmem:[%s278 + $0x40] sm:$0xff]
      %v297 = vld [vmem:[%s278 + $0x48] sm:$0xff]
      %v298 = vld [vmem:[%s278 + $0x50] sm:$0xff]
      %v299 = vld [vmem:[%s278 + $0x58] sm:$0xff]
      %v300 = vld [vmem:[%s278 + $0x60] sm:$0xff]
      %v301 = vld [vmem:[%s278 + $0x68] sm:$0xff]
      %v302 = vld [vmem:[%s278 + $0x70] sm:$0xff]
      %v303 = vld [vmem:[%s278 + $0x78] sm:$0xff]
      %v304 = vld [vmem:[%s1] sm:$0xff]
      %v305 = vld [vmem:[%s1 + $0x8] sm:$0xff]
      %v306 = vld [vmem:[%s1 + $0x10] sm:$0xff]
      %v307 = vld [vmem:[%s1 + $0x18] sm:$0xff]
      %v308 = vld [vmem:[%s1 + $0x20] sm:$0xff]
      %v309 = vld [vmem:[%s1 + $0x28] sm:$0xff]
      %v310 = vld [vmem:[%s1 + $0x30] sm:$0xff]
      %v311 = vld [vmem:[%s1 + $0x38] sm:$0xff]
      %v312 = vld [vmem:[%s2] sm:$0xff]
      %v313 = vld [vmem:[%s2 + $0x8] sm:$0xff]
      %v314 = vld [vmem:[%s2 + $0x10] sm:$0xff]
      %v315 = vld [vmem:[%s2 + $0x18] sm:$0xff]
      %v316 = vld [vmem:[%s4] sm:$0xff]
      %v317 = vld [vmem:[%s4 + $0x8] sm:$0xff]
      %v318 = vld [vmem:[%s4 + $0x10] sm:$0xff]
      %v319 = vld [vmem:[%s4 + $0x18] sm:$0xff]
      %v320 = vld [vmem:[%s3] sm:$0x1]
      %v321 = vld [vmem:[%s5] sm:$0x1]
      %v323 = vlaneseq
      %v324 = vshrl.u32 %v323, 7
      %v325 = vsub.s32 0, %v324
      %v326 = vrot.slane %v320, %v325
      %vm328 = vcmask 261120
      %v330 = vsel %vm328, %v288, 0
      %v333 = vsel %vm328, %v290, 0
      %v336 = vsel %vm328, %v292, 0
      %v339 = vsel %vm328, %v294, 0
      %v342 = vsel %vm328, %v296, 0
      %v345 = vsel %vm328, %v298, 0
      %v348 = vsel %vm328, %v300, 0
      %v351 = vsel %vm328, %v302, 0
      %353 = vmatprep.subr.mxu0 0.0
      %354 = vmatpush1.msra.mxu0 0.0
      %355 = vmatprep.subr.mxu0 0.0
      %356 = vmatpush1.msra.mxu0 0.0
      %357 = vmatprep.subr.mxu0 0.0
      %358 = vmatpush1.msra.mxu0 0.0
      %359 = vmatprep.subr.mxu0 0.0
      %360 = vmatpush1.msra.mxu0 0.0
      %361 = vmatprep.subr.mxu0 0.0
      %362 = vmatpush1.msra.mxu0 0.0
      %363 = vmatprep.subr.mxu0 0.0
      %364 = vmatpush1.msra.mxu0 0.0
      %365 = vmatprep.subr.mxu0 0.0
      %366 = vmatpush1.msra.mxu0 0.0
      %367 = vmatprep.subr.mxu0 0.0
      %368 = vmatpush1.msra.mxu0 0.0
      %369 = vmatprep.subr.mxu0 0.0
      %370 = vmatpush1.msra.mxu0 0.0
      %371 = vmatprep.subr.mxu0 0.0
      %372 = vmatpush1.msra.mxu0 0.0
      %373 = vmatprep.subr.mxu0 0.0
      %374 = vmatpush1.msra.mxu0 0.0
      %375 = vmatprep.subr.mxu0 0.0
      %376 = vmatpush1.msra.mxu0 0.0
      %377 = vmatprep.subr.mxu0 0.0
      %378 = vmatpush1.msra.mxu0 %v315
      %379 = vmatprep.subr.mxu0 0.0
      %380 = vmatpush1.msra.mxu0 %v314
      %381 = vmatprep.subr.mxu0 0.0
      %382 = vmatpush1.msra.mxu0 %v313
      %383 = vmatprep.subr.mxu0 0.0
      %384 = vmatpush1.msra.mxu0 %v312
      %385 = vmatprep.subr.mxu0 0.0
      %386 = vmatpush2.msra.mxu0 0.0
      %387 = vmatprep.subr.mxu0 0.0
      %388 = vmatpush2.msra.mxu0 0.0
      %389 = vmatprep.subr.mxu0 0.0
      %390 = vmatpush2.msra.mxu0 0.0
      %391 = vmatprep.subr.mxu0 0.0
      %392 = vmatpush2.msra.mxu0 0.0
      %393 = vmatprep.subr.mxu0 0.0
      %394 = vmatpush2.msra.mxu0 0.0
      %395 = vmatprep.subr.mxu0 0.0
      %396 = vmatpush2.msra.mxu0 0.0
      %397 = vmatprep.subr.mxu0 0.0
      %398 = vmatpush2.msra.mxu0 0.0
      %399 = vmatprep.subr.mxu0 0.0
      %400 = vmatpush2.msra.mxu0 0.0
      %401 = vmatprep.subr.mxu0 0.0
      %402 = vmatpush2.msra.mxu0 0.0
      %403 = vmatprep.subr.mxu0 0.0
      %404 = vmatpush2.msra.mxu0 0.0
      %405 = vmatprep.subr.mxu0 0.0
      %406 = vmatpush2.msra.mxu0 0.0
      %407 = vmatprep.subr.mxu0 0.0
      %408 = vmatpush2.msra.mxu0 0.0
      %409 = vmatprep.subr.mxu0 0.0
      %410 = vmatpush2.msra.mxu0 0.0
      %411 = vmatprep.subr.mxu0 0.0
      %412 = vmatpush2.msra.mxu0 0.0
      %413 = vmatprep.subr.mxu0 0.0
      %414 = vmatpush2.msra.mxu0 0.0
      %415 = vmatprep.subr.mxu0 0.0
      %416 = vmatpush2.msra.mxu0 0.0
      %417 = vmatprep.mubr.f32.mxu0 0.0
      %418 = vmatmul.mubr.f32.gmra.mxu0 %v330
      %v419 = vpop.f32.mrf.mxu0
      %v420 = vadd.f32 %v326, %v419
      %v421 = vpop.f32.mrf.mxu0
      %422 = vmatprep.mubr.f32.mxu0 0.0
      %423 = vmatmul.mubr.f32.gmra.mxu0 %v333
      %v424 = vpop.f32.mrf.mxu0
      %v425 = vadd.f32 %v326, %v424
      %v426 = vpop.f32.mrf.mxu0
      %427 = vmatprep.mubr.f32.mxu0 0.0
      %428 = vmatmul.mubr.f32.gmra.mxu0 %v336
      %v429 = vpop.f32.mrf.mxu0
      %v430 = vadd.f32 %v326, %v429
      %v431 = vpop.f32.mrf.mxu0
      %432 = vmatprep.mubr.f32.mxu0 0.0
      %433 = vmatmul.mubr.f32.gmra.mxu0 %v339
      %v434 = vpop.f32.mrf.mxu0
      %v435 = vadd.f32 %v326, %v434
      %v436 = vpop.f32.mrf.mxu0
      %437 = vmatprep.mubr.f32.mxu0 0.0
      %438 = vmatmul.mubr.f32.gmra.mxu0 %v342
      %v439 = vpop.f32.mrf.mxu0
      %v440 = vadd.f32 %v326, %v439
      %v441 = vpop.f32.mrf.mxu0
      %442 = vmatprep.mubr.f32.mxu0 0.0
      %443 = vmatmul.mubr.f32.gmra.mxu0 %v345
      %v444 = vpop.f32.mrf.mxu0
      %v445 = vadd.f32 %v326, %v444
      %v446 = vpop.f32.mrf.mxu0
      %447 = vmatprep.mubr.f32.mxu0 0.0
      %448 = vmatmul.mubr.f32.gmra.mxu0 %v348
      %v449 = vpop.f32.mrf.mxu0
      %v450 = vadd.f32 %v326, %v449
      %v451 = vpop.f32.mrf.mxu0
      %452 = vmatprep.mubr.f32.mxu0 0.0
      %453 = vmatmul.mubr.f32.gmra.mxu0 %v351
      %v454 = vpop.f32.mrf.mxu0
      %v455 = vadd.f32 %v326, %v454
      %v456 = vpop.f32.mrf.mxu0
      %457 = vdwg.mxu0
      %vm458 = vcmask 523264
      %v460 = vsel %vm458, %v304, 0
      %v463 = vsel %vm458, %v305, 0
      %v466 = vsel %vm458, %v306, 0
      %v469 = vsel %vm458, %v307, 0
      %v472 = vsel %vm458, %v308, 0
      %v475 = vsel %vm458, %v309, 0
      %v478 = vsel %vm458, %v310, 0
      %v481 = vsel %vm458, %v311, 0
      %483 = vmatprep.subr.mxu0 0.0
      %484 = vmatpush1.msra.mxu0 0.0
      %485 = vmatprep.subr.mxu0 0.0
      %486 = vmatpush1.msra.mxu0 0.0
      %487 = vmatprep.subr.mxu0 0.0
      %488 = vmatpush1.msra.mxu0 0.0
      %489 = vmatprep.subr.mxu0 0.0
      %490 = vmatpush1.msra.mxu0 0.0
      %491 = vmatprep.subr.mxu0 0.0
      %492 = vmatpush1.msra.mxu0 0.0
      %493 = vmatprep.subr.mxu0 0.0
      %494 = vmatpush1.msra.mxu0 0.0
      %495 = vmatprep.subr.mxu0 0.0
      %496 = vmatpush1.msra.mxu0 0.0
      %497 = vmatprep.subr.mxu0 0.0
      %498 = vmatpush1.msra.mxu0 0.0
      %499 = vmatprep.subr.mxu0 0.0
      %500 = vmatpush1.msra.mxu0 %v455
      %501 = vmatprep.subr.mxu0 0.0
      %502 = vmatpush1.msra.mxu0 %v450
      %503 = vmatprep.subr.mxu0 0.0
      %504 = vmatpush1.msra.mxu0 %v445
      %505 = vmatprep.subr.mxu0 0.0
      %506 = vmatpush1.msra.mxu0 %v440
      %507 = vmatprep.subr.mxu0 0.0
      %508 = vmatpush1.msra.mxu0 %v435
      %509 = vmatprep.subr.mxu0 0.0
      %510 = vmatpush1.msra.mxu0 %v430
      %511 = vmatprep.subr.mxu0 0.0
      %512 = vmatpush1.msra.mxu0 %v425
      %513 = vmatprep.subr.mxu0 0.0
      %514 = vmatpush1.msra.mxu0 %v420
      %515 = vmatprep.subr.mxu0 0.0
      %516 = vmatpush2.msra.mxu0 0.0
      %517 = vmatprep.subr.mxu0 0.0
      %518 = vmatpush2.msra.mxu0 0.0
      %519 = vmatprep.subr.mxu0 0.0
      %520 = vmatpush2.msra.mxu0 0.0
      %521 = vmatprep.subr.mxu0 0.0
      %522 = vmatpush2.msra.mxu0 0.0
      %523 = vmatprep.subr.mxu0 0.0
      %524 = vmatpush2.msra.mxu0 0.0
      %525 = vmatprep.subr.mxu0 0.0
      %526 = vmatpush2.msra.mxu0 0.0
      %527 = vmatprep.subr.mxu0 0.0
      %528 = vmatpush2.msra.mxu0 0.0
      %529 = vmatprep.subr.mxu0 0.0
      %530 = vmatpush2.msra.mxu0 0.0
      %531 = vmatprep.subr.mxu0 0.0
      %532 = vmatpush2.msra.mxu0 0.0
      %533 = vmatprep.subr.mxu0 0.0
      %534 = vmatpush2.msra.mxu0 0.0
      %535 = vmatprep.subr.mxu0 0.0
      %536 = vmatpush2.msra.mxu0 0.0
      %537 = vmatprep.subr.mxu0 0.0
      %538 = vmatpush2.msra.mxu0 0.0
      %539 = vmatprep.subr.mxu0 0.0
      %540 = vmatpush2.msra.mxu0 0.0
      %541 = vmatprep.subr.mxu0 0.0
      %542 = vmatpush2.msra.mxu0 0.0
      %543 = vmatprep.subr.mxu0 0.0
      %544 = vmatpush2.msra.mxu0 0.0
      %545 = vmatprep.subr.mxu0 0.0
      %546 = vmatpush2.msra.mxu0 0.0
      %547 = vmatprep.mubr.f32.mxu0 0.0
      %548 = vmatmul.mubr.f32.gmra.mxu0 %v460
      %v549 = vpop.f32.mrf.mxu0
      %v550 = vadd.f32 0.0, %v549
      %v551 = vpop.f32.mrf.mxu0
      %552 = vmatprep.mubr.f32.mxu0 0.0
      %553 = vmatmul.mubr.f32.gmra.mxu0 %v463
      %v554 = vpop.f32.mrf.mxu0
      %v555 = vadd.f32 0.0, %v554
      %v556 = vpop.f32.mrf.mxu0
      %557 = vmatprep.mubr.f32.mxu0 0.0
      %558 = vmatmul.mubr.f32.gmra.mxu0 %v466
      %v559 = vpop.f32.mrf.mxu0
      %v560 = vadd.f32 0.0, %v559
      %v561 = vpop.f32.mrf.mxu0
      %562 = vmatprep.mubr.f32.mxu0 0.0
      %563 = vmatmul.mubr.f32.gmra.mxu0 %v469
      %v564 = vpop.f32.mrf.mxu0
      %v565 = vadd.f32 0.0, %v564
      %v566 = vpop.f32.mrf.mxu0
      %567 = vmatprep.mubr.f32.mxu0 0.0
      %568 = vmatmul.mubr.f32.gmra.mxu0 %v472
      %v569 = vpop.f32.mrf.mxu0
      %v570 = vadd.f32 0.0, %v569
      %v571 = vpop.f32.mrf.mxu0
      %572 = vmatprep.mubr.f32.mxu0 0.0
      %573 = vmatmul.mubr.f32.gmra.mxu0 %v475
      %v574 = vpop.f32.mrf.mxu0
      %v575 = vadd.f32 0.0, %v574
      %v576 = vpop.f32.mrf.mxu0
      %577 = vmatprep.mubr.f32.mxu0 0.0
      %578 = vmatmul.mubr.f32.gmra.mxu0 %v478
      %v579 = vpop.f32.mrf.mxu0
      %v580 = vadd.f32 0.0, %v579
      %v581 = vpop.f32.mrf.mxu0
      %582 = vmatprep.mubr.f32.mxu0 0.0
      %583 = vmatmul.mubr.f32.gmra.mxu0 %v481
      %v584 = vpop.f32.mrf.mxu0
      %v585 = vadd.f32 0.0, %v584
      %v586 = vpop.f32.mrf.mxu0
      %587 = vdwg.mxu0
      %v589 = vlaneseq
      %v590 = vshrl.u32 %v589, 7
      %v591 = vsub.s32 0, %v590
      %v592 = vrot.slane %v321, %v591
      %v595 = vsel %vm328, %v550, 0
      %v598 = vsel %vm328, %v555, 0
      %v601 = vsel %vm328, %v560, 0
      %v604 = vsel %vm328, %v565, 0
      %v607 = vsel %vm328, %v570, 0
      %v610 = vsel %vm328, %v575, 0
      %v613 = vsel %vm328, %v580, 0
      %v616 = vsel %vm328, %v585, 0
      %618 = vmatprep.subr.mxu0 0.0
      %619 = vmatpush1.msra.mxu0 0.0
      %620 = vmatprep.subr.mxu0 0.0
      %621 = vmatpush1.msra.mxu0 0.0
      %622 = vmatprep.subr.mxu0 0.0
      %623 = vmatpush1.msra.mxu0 0.0
      %624 = vmatprep.subr.mxu0 0.0
      %625 = vmatpush1.msra.mxu0 0.0
      %626 = vmatprep.subr.mxu0 0.0
      %627 = vmatpush1.msra.mxu0 0.0
      %628 = vmatprep.subr.mxu0 0.0
      %629 = vmatpush1.msra.mxu0 0.0
      %630 = vmatprep.subr.mxu0 0.0
      %631 = vmatpush1.msra.mxu0 0.0
      %632 = vmatprep.subr.mxu0 0.0
      %633 = vmatpush1.msra.mxu0 0.0
      %634 = vmatprep.subr.mxu0 0.0
      %635 = vmatpush1.msra.mxu0 0.0
      %636 = vmatprep.subr.mxu0 0.0
      %637 = vmatpush1.msra.mxu0 0.0
      %638 = vmatprep.subr.mxu0 0.0
      %639 = vmatpush1.msra.mxu0 0.0
      %640 = vmatprep.subr.mxu0 0.0
      %641 = vmatpush1.msra.mxu0 0.0
      %642 = vmatprep.subr.mxu0 0.0
      %643 = vmatpush1.msra.mxu0 %v319
      %644 = vmatprep.subr.mxu0 0.0
      %645 = vmatpush1.msra.mxu0 %v318
      %646 = vmatprep.subr.mxu0 0.0
      %647 = vmatpush1.msra.mxu0 %v317
      %648 = vmatprep.subr.mxu0 0.0
      %649 = vmatpush1.msra.mxu0 %v316
      %650 = vmatprep.subr.mxu0 0.0
      %651 = vmatpush2.msra.mxu0 0.0
      %652 = vmatprep.subr.mxu0 0.0
      %653 = vmatpush2.msra.mxu0 0.0
      %654 = vmatprep.subr.mxu0 0.0
      %655 = vmatpush2.msra.mxu0 0.0
      %656 = vmatprep.subr.mxu0 0.0
      %657 = vmatpush2.msra.mxu0 0.0
      %658 = vmatprep.subr.mxu0 0.0
      %659 = vmatpush2.msra.mxu0 0.0
      %660 = vmatprep.subr.mxu0 0.0
      %661 = vmatpush2.msra.mxu0 0.0
      %662 = vmatprep.subr.mxu0 0.0
      %663 = vmatpush2.msra.mxu0 0.0
      %664 = vmatprep.subr.mxu0 0.0
      %665 = vmatpush2.msra.mxu0 0.0
      %666 = vmatprep.subr.mxu0 0.0
      %667 = vmatpush2.msra.mxu0 0.0
      %668 = vmatprep.subr.mxu0 0.0
      %669 = vmatpush2.msra.mxu0 0.0
      %670 = vmatprep.subr.mxu0 0.0
      %671 = vmatpush2.msra.mxu0 0.0
      %672 = vmatprep.subr.mxu0 0.0
      %673 = vmatpush2.msra.mxu0 0.0
      %674 = vmatprep.subr.mxu0 0.0
      %675 = vmatpush2.msra.mxu0 0.0
      %676 = vmatprep.subr.mxu0 0.0
      %677 = vmatpush2.msra.mxu0 0.0
      %678 = vmatprep.subr.mxu0 0.0
      %679 = vmatpush2.msra.mxu0 0.0
      %680 = vmatprep.subr.mxu0 0.0
      %681 = vmatpush2.msra.mxu0 0.0
      %682 = vmatprep.mubr.f32.mxu0 0.0
      %683 = vmatmul.mubr.f32.gmra.mxu0 %v595
      %v684 = vpop.f32.mrf.mxu0
      %v685 = vadd.f32 %v592, %v684
      %v686 = vpop.f32.mrf.mxu0
      %687 = vmatprep.mubr.f32.mxu0 0.0
      %688 = vmatmul.mubr.f32.gmra.mxu0 %v598
      %v689 = vpop.f32.mrf.mxu0
      %v690 = vadd.f32 %v592, %v689
      %v691 = vpop.f32.mrf.mxu0
      %692 = vmatprep.mubr.f32.mxu0 0.0
      %693 = vmatmul.mubr.f32.gmra.mxu0 %v601
      %v694 = vpop.f32.mrf.mxu0
      %v695 = vadd.f32 %v592, %v694
      %v696 = vpop.f32.mrf.mxu0
      %697 = vmatprep.mubr.f32.mxu0 0.0
      %698 = vmatmul.mubr.f32.gmra.mxu0 %v604
      %v699 = vpop.f32.mrf.mxu0
      %v700 = vadd.f32 %v592, %v699
      %v701 = vpop.f32.mrf.mxu0
      %702 = vmatprep.mubr.f32.mxu0 0.0
      %703 = vmatmul.mubr.f32.gmra.mxu0 %v607
      %v704 = vpop.f32.mrf.mxu0
      %v705 = vadd.f32 %v592, %v704
      %v706 = vpop.f32.mrf.mxu0
      %707 = vmatprep.mubr.f32.mxu0 0.0
      %708 = vmatmul.mubr.f32.gmra.mxu0 %v610
      %v709 = vpop.f32.mrf.mxu0
      %v710 = vadd.f32 %v592, %v709
      %v711 = vpop.f32.mrf.mxu0
      %712 = vmatprep.mubr.f32.mxu0 0.0
      %713 = vmatmul.mubr.f32.gmra.mxu0 %v613
      %v714 = vpop.f32.mrf.mxu0
      %v715 = vadd.f32 %v592, %v714
      %v716 = vpop.f32.mrf.mxu0
      %717 = vmatprep.mubr.f32.mxu0 0.0
      %718 = vmatmul.mubr.f32.gmra.mxu0 %v616
      %v719 = vpop.f32.mrf.mxu0
      %v720 = vadd.f32 %v592, %v719
      %v721 = vpop.f32.mrf.mxu0
      %722 = vdwg.mxu0
      %723 = vst.msk [vmem:[%s287] sm:$0xff] %vm328, %v685
      %724 = vst.msk [vmem:[%s287 + $0x10] sm:$0xff] %vm328, %v690
      %725 = vst.msk [vmem:[%s287 + $0x20] sm:$0xff] %vm328, %v695
      %726 = vst.msk [vmem:[%s287 + $0x30] sm:$0xff] %vm328, %v700
      %727 = vst.msk [vmem:[%s287 + $0x40] sm:$0xff] %vm328, %v705
      %728 = vst.msk [vmem:[%s287 + $0x50] sm:$0xff] %vm328, %v710
      %729 = vst.msk [vmem:[%s287 + $0x60] sm:$0xff] %vm328, %v715
      %730 = vst.msk [vmem:[%s287 + $0x70] sm:$0xff] %vm328, %v720
      %v732 = vsel %vm328, %v289, 0
      %v735 = vsel %vm328, %v291, 0
      %v738 = vsel %vm328, %v293, 0
      %v741 = vsel %vm328, %v295, 0
      %v744 = vsel %vm328, %v297, 0
      %v747 = vsel %vm328, %v299, 0
      %v750 = vsel %vm328, %v301, 0
      %v753 = vsel %vm328, %v303, 0
      %755 = vmatprep.subr.mxu0 0.0
      %756 = vmatpush1.msra.mxu0 0.0
      %757 = vmatprep.subr.mxu0 0.0
      %758 = vmatpush1.msra.mxu0 0.0
      %759 = vmatprep.subr.mxu0 0.0
      %760 = vmatpush1.msra.mxu0 0.0
      %761 = vmatprep.subr.mxu0 0.0
      %762 = vmatpush1.msra.mxu0 0.0
      %763 = vmatprep.subr.mxu0 0.0
      %764 = vmatpush1.msra.mxu0 0.0
      %765 = vmatprep.subr.mxu0 0.0
      %766 = vmatpush1.msra.mxu0 0.0
      %767 = vmatprep.subr.mxu0 0.0
      %768 = vmatpush1.msra.mxu0 0.0
      %769 = vmatprep.subr.mxu0 0.0
      %770 = vmatpush1.msra.mxu0 0.0
      %771 = vmatprep.subr.mxu0 0.0
      %772 = vmatpush1.msra.mxu0 0.0
      %773 = vmatprep.subr.mxu0 0.0
      %774 = vmatpush1.msra.mxu0 0.0
      %775 = vmatprep.subr.mxu0 0.0
      %776 = vmatpush1.msra.mxu0 0.0
      %777 = vmatprep.subr.mxu0 0.0
      %778 = vmatpush1.msra.mxu0 0.0
      %779 = vmatprep.subr.mxu0 0.0
      %780 = vmatpush1.msra.mxu0 %v315
      %781 = vmatprep.subr.mxu0 0.0
      %782 = vmatpush1.msra.mxu0 %v314
      %783 = vmatprep.subr.mxu0 0.0
      %784 = vmatpush1.msra.mxu0 %v313
      %785 = vmatprep.subr.mxu0 0.0
      %786 = vmatpush1.msra.mxu0 %v312
      %787 = vmatprep.subr.mxu0 0.0
      %788 = vmatpush2.msra.mxu0 0.0
      %789 = vmatprep.subr.mxu0 0.0
      %790 = vmatpush2.msra.mxu0 0.0
      %791 = vmatprep.subr.mxu0 0.0
      %792 = vmatpush2.msra.mxu0 0.0
      %793 = vmatprep.subr.mxu0 0.0
      %794 = vmatpush2.msra.mxu0 0.0
      %795 = vmatprep.subr.mxu0 0.0
      %796 = vmatpush2.msra.mxu0 0.0
      %797 = vmatprep.subr.mxu0 0.0
      %798 = vmatpush2.msra.mxu0 0.0
      %799 = vmatprep.subr.mxu0 0.0
      %800 = vmatpush2.msra.mxu0 0.0
      %801 = vmatprep.subr.mxu0 0.0
      %802 = vmatpush2.msra.mxu0 0.0
      %803 = vmatprep.subr.mxu0 0.0
      %804 = vmatpush2.msra.mxu0 0.0
      %805 = vmatprep.subr.mxu0 0.0
      %806 = vmatpush2.msra.mxu0 0.0
      %807 = vmatprep.subr.mxu0 0.0
      %808 = vmatpush2.msra.mxu0 0.0
      %809 = vmatprep.subr.mxu0 0.0
      %810 = vmatpush2.msra.mxu0 0.0
      %811 = vmatprep.subr.mxu0 0.0
      %812 = vmatpush2.msra.mxu0 0.0
      %813 = vmatprep.subr.mxu0 0.0
      %814 = vmatpush2.msra.mxu0 0.0
      %815 = vmatprep.subr.mxu0 0.0
      %816 = vmatpush2.msra.mxu0 0.0
      %817 = vmatprep.subr.mxu0 0.0
      %818 = vmatpush2.msra.mxu0 0.0
      %819 = vmatprep.mubr.f32.mxu0 0.0
      %820 = vmatmul.mubr.f32.gmra.mxu0 %v732
      %v821 = vpop.f32.mrf.mxu0
      %v822 = vadd.f32 %v326, %v821
      %v823 = vpop.f32.mrf.mxu0
      %824 = vmatprep.mubr.f32.mxu0 0.0
      %825 = vmatmul.mubr.f32.gmra.mxu0 %v735
      %v826 = vpop.f32.mrf.mxu0
      %v827 = vadd.f32 %v326, %v826
      %v828 = vpop.f32.mrf.mxu0
      %829 = vmatprep.mubr.f32.mxu0 0.0
      %830 = vmatmul.mubr.f32.gmra.mxu0 %v738
      %v831 = vpop.f32.mrf.mxu0
      %v832 = vadd.f32 %v326, %v831
      %v833 = vpop.f32.mrf.mxu0
      %834 = vmatprep.mubr.f32.mxu0 0.0
      %835 = vmatmul.mubr.f32.gmra.mxu0 %v741
      %v836 = vpop.f32.mrf.mxu0
      %v837 = vadd.f32 %v326, %v836
      %v838 = vpop.f32.mrf.mxu0
      %839 = vmatprep.mubr.f32.mxu0 0.0
      %840 = vmatmul.mubr.f32.gmra.mxu0 %v744
      %v841 = vpop.f32.mrf.mxu0
      %v842 = vadd.f32 %v326, %v841
      %v843 = vpop.f32.mrf.mxu0
      %844 = vmatprep.mubr.f32.mxu0 0.0
      %845 = vmatmul.mubr.f32.gmra.mxu0 %v747
      %v846 = vpop.f32.mrf.mxu0
      %v847 = vadd.f32 %v326, %v846
      %v848 = vpop.f32.mrf.mxu0
      %849 = vmatprep.mubr.f32.mxu0 0.0
      %850 = vmatmul.mubr.f32.gmra.mxu0 %v750
      %v851 = vpop.f32.mrf.mxu0
      %v852 = vadd.f32 %v326, %v851
      %v853 = vpop.f32.mrf.mxu0
      %854 = vmatprep.mubr.f32.mxu0 0.0
      %855 = vmatmul.mubr.f32.gmra.mxu0 %v753
      %v856 = vpop.f32.mrf.mxu0
      %v857 = vadd.f32 %v326, %v856
      %v858 = vpop.f32.mrf.mxu0
      %859 = vdwg.mxu0
      %860 = vmatprep.subr.mxu0 0.0
      %861 = vmatpush1.msra.mxu0 0.0
      %862 = vmatprep.subr.mxu0 0.0
      %863 = vmatpush1.msra.mxu0 0.0
      %864 = vmatprep.subr.mxu0 0.0
      %865 = vmatpush1.msra.mxu0 0.0
      %866 = vmatprep.subr.mxu0 0.0
      %867 = vmatpush1.msra.mxu0 0.0
      %868 = vmatprep.subr.mxu0 0.0
      %869 = vmatpush1.msra.mxu0 0.0
      %870 = vmatprep.subr.mxu0 0.0
      %871 = vmatpush1.msra.mxu0 0.0
      %872 = vmatprep.subr.mxu0 0.0
      %873 = vmatpush1.msra.mxu0 0.0
      %874 = vmatprep.subr.mxu0 0.0
      %875 = vmatpush1.msra.mxu0 0.0
      %876 = vmatprep.subr.mxu0 0.0
      %877 = vmatpush1.msra.mxu0 %v857
      %878 = vmatprep.subr.mxu0 0.0
      %879 = vmatpush1.msra.mxu0 %v852
      %880 = vmatprep.subr.mxu0 0.0
      %881 = vmatpush1.msra.mxu0 %v847
      %882 = vmatprep.subr.mxu0 0.0
      %883 = vmatpush1.msra.mxu0 %v842
      %884 = vmatprep.subr.mxu0 0.0
      %885 = vmatpush1.msra.mxu0 %v837
      %886 = vmatprep.subr.mxu0 0.0
      %887 = vmatpush1.msra.mxu0 %v832
      %888 = vmatprep.subr.mxu0 0.0
      %889 = vmatpush1.msra.mxu0 %v827
      %890 = vmatprep.subr.mxu0 0.0
      %891 = vmatpush1.msra.mxu0 %v822
      %892 = vmatprep.subr.mxu0 0.0
      %893 = vmatpush2.msra.mxu0 0.0
      %894 = vmatprep.subr.mxu0 0.0
      %895 = vmatpush2.msra.mxu0 0.0
      %896 = vmatprep.subr.mxu0 0.0
      %897 = vmatpush2.msra.mxu0 0.0
      %898 = vmatprep.subr.mxu0 0.0
      %899 = vmatpush2.msra.mxu0 0.0
      %900 = vmatprep.subr.mxu0 0.0
      %901 = vmatpush2.msra.mxu0 0.0
      %902 = vmatprep.subr.mxu0 0.0
      %903 = vmatpush2.msra.mxu0 0.0
      %904 = vmatprep.subr.mxu0 0.0
      %905 = vmatpush2.msra.mxu0 0.0
      %906 = vmatprep.subr.mxu0 0.0
      %907 = vmatpush2.msra.mxu0 0.0
      %908 = vmatprep.subr.mxu0 0.0
      %909 = vmatpush2.msra.mxu0 0.0
      %910 = vmatprep.subr.mxu0 0.0
      %911 = vmatpush2.msra.mxu0 0.0
      %912 = vmatprep.subr.mxu0 0.0
      %913 = vmatpush2.msra.mxu0 0.0
      %914 = vmatprep.subr.mxu0 0.0
      %915 = vmatpush2.msra.mxu0 0.0
      %916 = vmatprep.subr.mxu0 0.0
      %917 = vmatpush2.msra.mxu0 0.0
      %918 = vmatprep.subr.mxu0 0.0
      %919 = vmatpush2.msra.mxu0 0.0
      %920 = vmatprep.subr.mxu0 0.0
      %921 = vmatpush2.msra.mxu0 0.0
      %922 = vmatprep.subr.mxu0 0.0
      %923 = vmatpush2.msra.mxu0 0.0
      %924 = vmatprep.mubr.f32.mxu0 0.0
      %925 = vmatmul.mubr.f32.gmra.mxu0 %v460
      %v926 = vpop.f32.mrf.mxu0
      %v927 = vadd.f32 0.0, %v926
      %v928 = vpop.f32.mrf.mxu0
      %929 = vmatprep.mubr.f32.mxu0 0.0
      %930 = vmatmul.mubr.f32.gmra.mxu0 %v463
      %v931 = vpop.f32.mrf.mxu0
      %v932 = vadd.f32 0.0, %v931
      %v933 = vpop.f32.mrf.mxu0
      %934 = vmatprep.mubr.f32.mxu0 0.0
      %935 = vmatmul.mubr.f32.gmra.mxu0 %v466
      %v936 = vpop.f32.mrf.mxu0
      %v937 = vadd.f32 0.0, %v936
      %v938 = vpop.f32.mrf.mxu0
      %939 = vmatprep.mubr.f32.mxu0 0.0
      %940 = vmatmul.mubr.f32.gmra.mxu0 %v469
      %v941 = vpop.f32.mrf.mxu0
      %v942 = vadd.f32 0.0, %v941
      %v943 = vpop.f32.mrf.mxu0
      %944 = vmatprep.mubr.f32.mxu0 0.0
      %945 = vmatmul.mubr.f32.gmra.mxu0 %v472
      %v946 = vpop.f32.mrf.mxu0
      %v947 = vadd.f32 0.0, %v946
      %v948 = vpop.f32.mrf.mxu0
      %949 = vmatprep.mubr.f32.mxu0 0.0
      %950 = vmatmul.mubr.f32.gmra.mxu0 %v475
      %v951 = vpop.f32.mrf.mxu0
      %v952 = vadd.f32 0.0, %v951
      %v953 = vpop.f32.mrf.mxu0
      %954 = vmatprep.mubr.f32.mxu0 0.0
      %955 = vmatmul.mubr.f32.gmra.mxu0 %v478
      %v956 = vpop.f32.mrf.mxu0
      %v957 = vadd.f32 0.0, %v956
      %v958 = vpop.f32.mrf.mxu0
      %959 = vmatprep.mubr.f32.mxu0 0.0
      %960 = vmatmul.mubr.f32.gmra.mxu0 %v481
      %v961 = vpop.f32.mrf.mxu0
      %v962 = vadd.f32 0.0, %v961
      %v963 = vpop.f32.mrf.mxu0
      %964 = vdwg.mxu0
      %v966 = vsel %vm328, %v927, 0
      %v969 = vsel %vm328, %v932, 0
      %v972 = vsel %vm328, %v937, 0
      %v975 = vsel %vm328, %v942, 0
      %v978 = vsel %vm328, %v947, 0
      %v981 = vsel %vm328, %v952, 0
      %v984 = vsel %vm328, %v957, 0
      %v987 = vsel %vm328, %v962, 0
      %989 = vmatprep.subr.mxu0 0.0
      %990 = vmatpush1.msra.mxu0 0.0
      %991 = vmatprep.subr.mxu0 0.0
      %992 = vmatpush1.msra.mxu0 0.0
      %993 = vmatprep.subr.mxu0 0.0
      %994 = vmatpush1.msra.mxu0 0.0
      %995 = vmatprep.subr.mxu0 0.0
      %996 = vmatpush1.msra.mxu0 0.0
      %997 = vmatprep.subr.mxu0 0.0
      %998 = vmatpush1.msra.mxu0 0.0
      %999 = vmatprep.subr.mxu0 0.0
      %1000 = vmatpush1.msra.mxu0 0.0
      %1001 = vmatprep.subr.mxu0 0.0
      %1002 = vmatpush1.msra.mxu0 0.0
      %1003 = vmatprep.subr.mxu0 0.0
      %1004 = vmatpush1.msra.mxu0 0.0
      %1005 = vmatprep.subr.mxu0 0.0
      %1006 = vmatpush1.msra.mxu0 0.0
      %1007 = vmatprep.subr.mxu0 0.0
      %1008 = vmatpush1.msra.mxu0 0.0
      %1009 = vmatprep.subr.mxu0 0.0
      %1010 = vmatpush1.msra.mxu0 0.0
      %1011 = vmatprep.subr.mxu0 0.0
      %1012 = vmatpush1.msra.mxu0 0.0
      %1013 = vmatprep.subr.mxu0 0.0
      %1014 = vmatpush1.msra.mxu0 %v319
      %1015 = vmatprep.subr.mxu0 0.0
      %1016 = vmatpush1.msra.mxu0 %v318
      %1017 = vmatprep.subr.mxu0 0.0
      %1018 = vmatpush1.msra.mxu0 %v317
      %1019 = vmatprep.subr.mxu0 0.0
      %1020 = vmatpush1.msra.mxu0 %v316
      %1021 = vmatprep.subr.mxu0 0.0
      %1022 = vmatpush2.msra.mxu0 0.0
      %1023 = vmatprep.subr.mxu0 0.0
      %1024 = vmatpush2.msra.mxu0 0.0
      %1025 = vmatprep.subr.mxu0 0.0
      %1026 = vmatpush2.msra.mxu0 0.0
      %1027 = vmatprep.subr.mxu0 0.0
      %1028 = vmatpush2.msra.mxu0 0.0
      %1029 = vmatprep.subr.mxu0 0.0
      %1030 = vmatpush2.msra.mxu0 0.0
      %1031 = vmatprep.subr.mxu0 0.0
      %1032 = vmatpush2.msra.mxu0 0.0
      %1033 = vmatprep.subr.mxu0 0.0
      %1034 = vmatpush2.msra.mxu0 0.0
      %1035 = vmatprep.subr.mxu0 0.0
      %1036 = vmatpush2.msra.mxu0 0.0
      %1037 = vmatprep.subr.mxu0 0.0
      %1038 = vmatpush2.msra.mxu0 0.0
      %1039 = vmatprep.subr.mxu0 0.0
      %1040 = vmatpush2.msra.mxu0 0.0
      %1041 = vmatprep.subr.mxu0 0.0
      %1042 = vmatpush2.msra.mxu0 0.0
      %1043 = vmatprep.subr.mxu0 0.0
      %1044 = vmatpush2.msra.mxu0 0.0
      %1045 = vmatprep.subr.mxu0 0.0
      %1046 = vmatpush2.msra.mxu0 0.0
      %1047 = vmatprep.subr.mxu0 0.0
      %1048 = vmatpush2.msra.mxu0 0.0
      %1049 = vmatprep.subr.mxu0 0.0
      %1050 = vmatpush2.msra.mxu0 0.0
      %1051 = vmatprep.subr.mxu0 0.0
      %1052 = vmatpush2.msra.mxu0 0.0
      %1053 = vmatprep.mubr.f32.mxu0 0.0
      %1054 = vmatmul.mubr.f32.gmra.mxu0 %v966
      %v1055 = vpop.f32.mrf.mxu0
      %v1056 = vadd.f32 %v592, %v1055
      %v1057 = vpop.f32.mrf.mxu0
      %1058 = vmatprep.mubr.f32.mxu0 0.0
      %1059 = vmatmul.mubr.f32.gmra.mxu0 %v969
      %v1060 = vpop.f32.mrf.mxu0
      %v1061 = vadd.f32 %v592, %v1060
      %v1062 = vpop.f32.mrf.mxu0
      %1063 = vmatprep.mubr.f32.mxu0 0.0
      %1064 = vmatmul.mubr.f32.gmra.mxu0 %v972
      %v1065 = vpop.f32.mrf.mxu0
      %v1066 = vadd.f32 %v592, %v1065
      %v1067 = vpop.f32.mrf.mxu0
      %1068 = vmatprep.mubr.f32.mxu0 0.0
      %1069 = vmatmul.mubr.f32.gmra.mxu0 %v975
      %v1070 = vpop.f32.mrf.mxu0
      %v1071 = vadd.f32 %v592, %v1070
      %v1072 = vpop.f32.mrf.mxu0
      %1073 = vmatprep.mubr.f32.mxu0 0.0
      %1074 = vmatmul.mubr.f32.gmra.mxu0 %v978
      %v1075 = vpop.f32.mrf.mxu0
      %v1076 = vadd.f32 %v592, %v1075
      %v1077 = vpop.f32.mrf.mxu0
      %1078 = vmatprep.mubr.f32.mxu0 0.0
      %1079 = vmatmul.mubr.f32.gmra.mxu0 %v981
      %v1080 = vpop.f32.mrf.mxu0
      %v1081 = vadd.f32 %v592, %v1080
      %v1082 = vpop.f32.mrf.mxu0
      %1083 = vmatprep.mubr.f32.mxu0 0.0
      %1084 = vmatmul.mubr.f32.gmra.mxu0 %v984
      %v1085 = vpop.f32.mrf.mxu0
      %v1086 = vadd.f32 %v592, %v1085
      %v1087 = vpop.f32.mrf.mxu0
      %1088 = vmatprep.mubr.f32.mxu0 0.0
      %1089 = vmatmul.mubr.f32.gmra.mxu0 %v987
      %v1090 = vpop.f32.mrf.mxu0
      %v1091 = vadd.f32 %v592, %v1090
      %v1092 = vpop.f32.mrf.mxu0
      %1093 = vdwg.mxu0
      %s1094 = scalar_lea.vmem %s287, 8
      %1095 = vst.msk [vmem:[%s1094] sm:$0xff] %vm328, %v1056
      %1096 = vst.msk [vmem:[%s1094 + $0x10] sm:$0xff] %vm328, %v1061
      %1097 = vst.msk [vmem:[%s1094 + $0x20] sm:$0xff] %vm328, %v1066
      %1098 = vst.msk [vmem:[%s1094 + $0x30] sm:$0xff] %vm328, %v1071
      %1099 = vst.msk [vmem:[%s1094 + $0x40] sm:$0xff] %vm328, %v1076
      %1100 = vst.msk [vmem:[%s1094 + $0x50] sm:$0xff] %vm328, %v1081
      %1101 = vst.msk [vmem:[%s1094 + $0x60] sm:$0xff] %vm328, %v1086
      %1102 = vst.msk [vmem:[%s1094 + $0x70] sm:$0xff] %vm328, %v1091
      %p1103 = scmp.lt.s32.totalorder %s21, 1
      %s1104 = scalar_select %p1103, %s21, 1
      %p1105 = scmp.lt.s32.totalorder %s22, 1
      %s1106 = scalar_select %p1105, %s22, 1
      %s1107 = smul.addr %s1106, 16
      %s1108 = smul.addr %s1104, 32
      %s1109 = sadd.s32 %s1107, %s1108
      %s1110 = smul.addr %s1109, 8
      %s1111 = scalar_lea.vmem %s6, %s1110
      // Predicated region
      $region45: #{local_attention_forward.1} parent=43 // pred_check
        %p1112 = pneg %p182
      $region46: #{local_attention_forward.1} parent=43 // pred_check_branch
        %1114 = sbr.rel (%p1112) target = $region48
      $region47: #{local_attention_forward.1} parent=43 // pred_region
        _
      $region48: #{local_attention_forward.1} parent=43 // pred_fallthru
        _
    $region44: #{local_attention_forward.1} parent=5 // pred_fallthru
      _
    %p1115 = scmp.le.s32.totalorder 2, %s12
    // Predicated region
    $region49: #{local_attention_forward.1} parent=5 // pred_check
      %p1116 = pneg %p1115
    $region50: #{local_attention_forward.1} parent=5 // pred_check_branch
      %1118 = sbr.rel (%p1116) target = $region52
    $region51: #{local_attention_forward.1} parent=5 // pred_region
      %s1119 = ssub.s32 %s12, 2
      // Predicated region
      $region53: #{local_attention_forward.1} parent=51 // pred_check
        %p1120 = pneg %p188
      $region54: #{local_attention_forward.1} parent=51 // pred_check_branch
        %1122 = sbr.rel (%p1120) target = $region56
      $region55: #{local_attention_forward.1} parent=51 // pred_region
        %p1123 = scmp.lt.s32.totalorder %s23, 1
        %s1124 = scalar_select %p1123, %s23, 1
        %p1125 = scmp.lt.s32.totalorder %s24, 1
        %s1126 = scalar_select %p1125, %s24, 1
        %s1127 = smul.addr %s1126, 16
        %s1128 = smul.addr %s1124, 32
        %s1129 = sadd.s32 %s1127, %s1128
        %s1130 = smul.addr %s1129, 8
        %s1131 = scalar_lea.vmem %s6, %s1130
      $region56: #{local_attention_forward.1} parent=51 // pred_fallthru
        _
    $region52: #{local_attention_forward.1} parent=5 // pred_fallthru
      _
  $region6: #{local_attention_forward.1} parent=0 // loop_footer
    %s16 = sadd.s32 1, %s12
  $region7: #{local_attention_forward.1} parent=0 // loop_footer_branch
    %11 = sbr.rel target = $region3
  $region8: #{local_attention_forward.1} parent=0 // loop_exit
    _

</llo_original>
